<compile_context>
chip_gen: v5e
topology: v5e:2x2
jax: 0.10.0
libtpu: 0.0.40
codegen_flags: <defaults>
</compile_context>

<pallas_src>
import functools
import math

import jax
import jax.numpy as jnp
from jax.experimental import pallas as pl
from jax.experimental.pallas import tpu as pltpu

# --------------------------------------------------------------------------
# configs (from the reference ssd.py)
# --------------------------------------------------------------------------
BASE_300 = [64, 64, 'M', 128, 128, 'M', 256, 256, 256, 'C',
            512, 512, 512, 'M', 512, 512, 512]
EXTRAS_300 = [256, 'S', 512, 128, 'S', 256, 128, 256, 128, 256]
MBOX_300 = [4, 6, 6, 6, 4, 4]


def _rup(x, m):
    return (x + m - 1) // m * m


def _default_vmem_limit():
    # v7x has 64 MiB physical VMEM; v5e/v6e have 128 MiB.  Stay <= 40 MiB so
    # double-buffered blocks never oversubscribe even on v7x (spatial tiling
    # of the direct conv keeps per-call footprints small anyway).
    try:
        cap = pltpu.get_tpu_info().vmem_capacity_bytes
    except Exception:          # hardware query unavailable -> assume v7x
        cap = 64 * 1024 * 1024
    return min(40 * 1024 * 1024, (cap * 5) // 8)


_VMEM_LIMIT = _default_vmem_limit()


# --------------------------------------------------------------------------
# Pallas kernel 1: tiled matmul + bias + optional fused ReLU
#   bf16 operands, f32 accumulation in a VMEM scratch (bias-initialised),
#   bf16 (or f32 for heads) output store on the last K step.
# --------------------------------------------------------------------------
def _matmul_bias_kernel(a_ref, b_ref, bias_ref, o_ref, acc_ref, *, relu):
    k = pl.program_id(2)

    @pl.when(k == 0)
    def _():
        # bias-initialised accumulator: the finalize step only does ReLU+cast.
        acc_ref[...] = jnp.broadcast_to(bias_ref[...], acc_ref.shape)

    acc_ref[...] += jnp.dot(a_ref[...], b_ref[...],
                            preferred_element_type=jnp.float32)

    @pl.when(k == pl.num_programs(2) - 1)
    def _():
        out = acc_ref[...]
        if relu:
            out = jnp.maximum(out, 0.0)
        o_ref[...] = out.astype(o_ref.dtype)


def _pick_n_tile(n):
    for t in (512, 256, 128):
        if n % t == 0:
            return t, n
    if n <= 256:
        return n, n                  # full-dim block (allowed by the tiling rule)
    return 128, _rup(n, 128)


def matmul_bias(a, b, bias, *, relu=False, out_dtype=jnp.bfloat16):
    M, K = a.shape
    _, N = b.shape
    a = a.astype(jnp.bfloat16)
    b = b.astype(jnp.bfloat16)

    tm = 256 if M >= 256 else _rup(M, 8)
    Mp = _rup(M, tm)
    tn, Np = _pick_n_tile(N)
    if K % 128 == 0:
        tk = 512 if K % 512 == 0 else (256 if K % 256 == 0 else 128)
    else:
        tk = K                       # full-K block: no zero padding of K (e.g. K=27)

    if Mp != M:
        a = jnp.pad(a, ((0, Mp - M), (0, 0)))
    if Np != N:
        b = jnp.pad(b, ((0, 0), (0, Np - N)))
        bias = jnp.pad(bias, (0, Np - N))
    bias_p = bias.reshape(1, Np).astype(jnp.float32)

    out = pl.pallas_call(
        functools.partial(_matmul_bias_kernel, relu=relu),
        out_shape=jax.ShapeDtypeStruct((Mp, Np), out_dtype),
        grid_spec=pltpu.PrefetchScalarGridSpec(
            num_scalar_prefetch=0,
            grid=(Mp // tm, Np // tn, K // tk),
            in_specs=[pl.BlockSpec((tm, tk), lambda i, j, k: (i, k)),
                      pl.BlockSpec((tk, tn), lambda i, j, k: (k, j)),
                      pl.BlockSpec((1, tn), lambda i, j, k: (0, j))],
            out_specs=pl.BlockSpec((tm, tn), lambda i, j, k: (i, j)),
            scratch_shapes=[pltpu.VMEM((tm, tn), jnp.float32)]),
        compiler_params=pltpu.CompilerParams(
            dimension_semantics=("parallel", "parallel", "arbitrary"),
            vmem_limit_bytes=_VMEM_LIMIT),
    )(a, b, bias_p)
    if (Mp, Np) != (M, N):
        out = out[:M, :N]
    return out


# --------------------------------------------------------------------------
# Pallas kernel 2: direct NHWC conv (stride 1), spatially tiled.
#   Grid (N, row-tiles, Cout-tiles).  A row slab with a (kh-1)*dil halo is
#   DMA'd from the padded HBM activation (pl.ANY) into VMEM once per (n, r)
#   and reused for every Cout tile; the kh*kw taps are gathered with in-VMEM
#   slices (bf16) and reduced on the MXU with f32 accumulation.
# --------------------------------------------------------------------------
def _direct_conv_kernel(x_hbm, w_ref, b_ref, o_ref, slab_ref, sem,
                        *, kh, kw, dil, th, relu):
    n = pl.program_id(0)
    r = pl.program_id(1)
    j = pl.program_id(2)
    Wo = o_ref.shape[2]
    tn = o_ref.shape[3]
    Cin = slab_ref.shape[2]
    slab_rows = slab_ref.shape[0]

    # Fetch the row slab (with halo) once per (n, r); reuse across all j.
    @pl.when(j == 0)
    def _():
        cp = pltpu.make_async_copy(
            x_hbm.at[n, pl.ds(r * th, slab_rows)], slab_ref, sem)
        cp.start()
        cp.wait()

    acc = jnp.zeros((th * Wo, tn), jnp.float32)
    for di in range(kh):
        for dj in range(kw):
            a = slab_ref[di * dil: di * dil + th,
                         dj * dil: dj * dil + Wo, :]          # (th, Wo, Cin) bf16
            acc = acc + jnp.dot(a.reshape(th * Wo, Cin), w_ref[di, dj],
                                preferred_element_type=jnp.float32)
    res = acc.reshape(th, Wo, tn) + b_ref[...]
    if relu:
        res = jnp.maximum(res, 0.0)
    o_ref[0] = res.astype(o_ref.dtype)


def _direct_tn(cout):
    if cout % 256 == 0:
        return 256
    if cout % 128 == 0:
        return 128
    return cout


def _direct_eligible(x, w, stride, padding, dilation):
    N, H, W, Cin = x.shape
    kh, kw, _, Cout = w.shape
    if stride != 1 or kh == 1 or kw == 1:
        return False
    Ho = H + 2 * padding - dilation * (kh - 1)
    Wo = W + 2 * padding - dilation * (kw - 1)
    if Ho <= 0 or Wo <= 0 or Wo % 8 or Cin % 8:
        return False
    # Row slab is always small (spatial tiling); just bound the weight block.
    if kh * kw * Cin * _direct_tn(Cout) * 2 > 8 * 1024 * 1024:
        return False
    return True


def _conv2d_direct(x, w, b, *, padding, dilation, relu, out_dtype):
    N, H, W, Cin = x.shape
    kh, kw, _, Cout = w.shape
    halo_h = dilation * (kh - 1)
    halo_w = dilation * (kw - 1)
    Hp, Wp = H + 2 * padding, W + 2 * padding
    Ho, Wo = Hp - halo_h, Wp - halo_w

    tn = _direct_tn(Cout)
    # keep the f32 accumulator slab (th*Wo, tn) at <= 128 KiB
    th = max(1, min(Ho, (128 * 1024) // (4 * tn * Wo)))
    R = pl.cdiv(Ho, th)
    Ho_pad = R * th
    Hp_pad = Ho_pad + halo_h
    slab_rows = th + halo_h

    xp = jnp.pad(x.astype(jnp.bfloat16),
                 ((0, 0), (padding, Hp_pad - H - padding),
                  (padding, padding), (0, 0)))

    out = pl.pallas_call(
        functools.partial(_direct_conv_kernel, kh=kh, kw=kw, dil=dilation,
                          th=th, relu=relu),
        out_shape=jax.ShapeDtypeStruct((N, Ho_pad, Wo, Cout), out_dtype),
        grid_spec=pltpu.PrefetchScalarGridSpec(
            num_scalar_prefetch=0,
            grid=(N, R, Cout // tn),
            in_specs=[pl.BlockSpec(memory_space=pl.ANY),
                      pl.BlockSpec((kh, kw, Cin, tn),
                                   lambda n, r, j: (0, 0, 0, j)),
                      pl.BlockSpec((1, tn), lambda n, r, j: (0, j))],
            out_specs=pl.BlockSpec((1, th, Wo, tn),
                                   lambda n, r, j: (n, r, 0, j)),
            scratch_shapes=[pltpu.VMEM((slab_rows, Wp, Cin), jnp.bfloat16),
                            pltpu.SemaphoreType.DMA(())]),
        compiler_params=pltpu.CompilerParams(
            dimension_semantics=("parallel", "parallel", "arbitrary"),
            vmem_limit_bytes=_VMEM_LIMIT),
    )(xp, w.astype(jnp.bfloat16), b.reshape(1, Cout).astype(jnp.float32))
    if Ho_pad != Ho:
        out = out[:, :Ho]
    return out


# --------------------------------------------------------------------------
# Pallas kernel 3: fused 2x2 max-pool (input is a free reshape of NHWC)
# --------------------------------------------------------------------------
def _pool2x2_kernel(x_ref, o_ref):
    C = o_ref.shape[2]
    m = jnp.maximum(x_ref[:, 0], x_ref[:, 1])          # (tm, Wo, 2C)
    o_ref[...] = jnp.maximum(m[:, :, :C], m[:, :, C:])


def max_pool_2x2(x, ceil_mode=False):
    N, H, W, C = x.shape
    ph, pw = H % 2, W % 2
    if ph or pw:
        if ceil_mode:
            x = jnp.pad(x, ((0, 0), (0, ph), (0, pw), (0, 0)),
                        constant_values=-jnp.inf)
        else:
            x = x[:, :H - ph, :W - pw, :]
        N, H, W, C = x.shape
    Ho, Wo = H // 2, W // 2
    xr = x.reshape(N * Ho, 2, Wo, 2 * C)               # free (contiguous) reshape
    M = N * Ho
    tm = min(64, _rup(M, 8))
    Mp = _rup(M, tm)
    if Mp != M:
        xr = jnp.pad(xr, ((0, Mp - M), (0, 0), (0, 0), (0, 0)))
    out = pl.pallas_call(
        _pool2x2_kernel,
        out_shape=jax.ShapeDtypeStruct((Mp, Wo, C), x.dtype),
        grid_spec=pltpu.PrefetchScalarGridSpec(
            num_scalar_prefetch=0,
            grid=(Mp // tm,),
            in_specs=[pl.BlockSpec((tm, 2, Wo, 2 * C), lambda i: (i, 0, 0, 0))],
            out_specs=pl.BlockSpec((tm, Wo, C), lambda i: (i, 0, 0))),
        compiler_params=pltpu.CompilerParams(
            dimension_semantics=("parallel",),
            vmem_limit_bytes=_VMEM_LIMIT),
    )(xr)
    return out[:M].reshape(N, Ho, Wo, C)


# --------------------------------------------------------------------------
# Pallas kernel 4: 3x3 stride-1 pad-1 max-pool (pool5) -- single kernel,
# padded map loaded once, taps gathered in VMEM (no 9x HBM copy).
# --------------------------------------------------------------------------
def _pool3x3_kernel(x_ref, o_ref):
    H, W = o_ref.shape[1], o_ref.shape[2]
    x = x_ref[0]                                       # (H+2, W+2, C)
    r = x[0:H, 0:W, :]
    for di in range(3):
        for dj in range(3):
            if di == 0 and dj == 0:
                continue
            r = jnp.maximum(r, x[di:di + H, dj:dj + W, :])
    o_ref[0] = r


def max_pool_3x3_s1_p1(x):
    N, H, W, C = x.shape
    xp = jnp.pad(x, ((0, 0), (1, 1), (1, 1), (0, 0)), constant_values=-jnp.inf)
    return pl.pallas_call(
        _pool3x3_kernel,
        out_shape=jax.ShapeDtypeStruct((N, H, W, C), x.dtype),
        grid_spec=pltpu.PrefetchScalarGridSpec(
            num_scalar_prefetch=0,
            grid=(N,),
            in_specs=[pl.BlockSpec((1, H + 2, W + 2, C),
                                   lambda n: (n, 0, 0, 0))],
            out_specs=pl.BlockSpec((1, H, W, C), lambda n: (n, 0, 0, 0))),
        compiler_params=pltpu.CompilerParams(
            dimension_semantics=("parallel",),
            vmem_limit_bytes=_VMEM_LIMIT),
    )(xp)


# --------------------------------------------------------------------------
# Pallas kernel 5: L2Norm (channel-wise L2 normalization + learned scale)
# --------------------------------------------------------------------------
def _l2norm_kernel(x_ref, w_ref, o_ref):
    x = x_ref[...].astype(jnp.float32)
    # NOTE: reference L2Norm adds eps to the norm (x / (norm + eps)); we add a
    # tiny eps inside the rsqrt -- numerically negligible difference.
    inv = jax.lax.rsqrt(jnp.sum(x * x, axis=1, keepdims=True) + 1e-12)
    o_ref[...] = (x * inv * w_ref[...]).astype(o_ref.dtype)


def l2norm(x, weight):                   # x: (N, H, W, C) bf16, weight: (C,)
    N, H, W, C = x.shape
    M = N * H * W
    tm = min(256, _rup(M, 8))
    Mp = _rup(M, tm)
    xr = x.reshape(M, C)
    if Mp != M:
        xr = jnp.pad(xr, ((0, Mp - M), (0, 0)))
    out = pl.pallas_call(
        _l2norm_kernel,
        out_shape=jax.ShapeDtypeStruct((Mp, C), jnp.bfloat16),
        grid_spec=pltpu.PrefetchScalarGridSpec(
            num_scalar_prefetch=0,
            grid=(Mp // tm,),
            in_specs=[pl.BlockSpec((tm, C), lambda i: (i, 0)),
                      pl.BlockSpec((1, C), lambda i: (0, 0))],
            out_specs=pl.BlockSpec((tm, C), lambda i: (i, 0))),
        compiler_params=pltpu.CompilerParams(
            dimension_semantics=("parallel",),
            vmem_limit_bytes=_VMEM_LIMIT),
    )(xr, weight.reshape(1, C).astype(jnp.float32))
    return out[:M].reshape(N, H, W, C)


# --------------------------------------------------------------------------
# plain-JAX glue: im2col (cold path only: stem, stride-2 / tiny maps), dispatch
# --------------------------------------------------------------------------
def _im2col(x, kh, kw, stride, padding, dilation):
    x = x.astype(jnp.bfloat16)                          # bf16 patch matrix
    N, H, W, C = x.shape
    xp = jnp.pad(x, ((0, 0), (padding, padding), (padding, padding), (0, 0)))
    Hp, Wp = H + 2 * padding, W + 2 * padding
    Ho = (Hp - dilation * (kh - 1) - 1) // stride + 1
    Wo = (Wp - dilation * (kw - 1) - 1) // stride + 1
    cols = []
    for i in range(kh):
        for j in range(kw):
            hs, ws = i * dilation, j * dilation
            sl = xp[:, hs: hs + (Ho - 1) * stride + 1: stride,
                       ws: ws + (Wo - 1) * stride + 1: stride, :]
            cols.append(sl)
    patches = jnp.stack(cols, axis=3)                   # (N, Ho, Wo, kh*kw, C)
    return patches.reshape(N * Ho * Wo, kh * kw * C), Ho, Wo


def _conv2d_im2col(x, w, b, *, stride, padding, dilation, relu, out_dtype):
    N = x.shape[0]
    KH, KW, Cin, Cout = w.shape
    patches, Ho, Wo = _im2col(x, KH, KW, stride, padding, dilation)
    out = matmul_bias(patches, w.reshape(KH * KW * Cin, Cout), b,
                      relu=relu, out_dtype=out_dtype)
    return out.reshape(N, Ho, Wo, Cout)


def conv2d(x, w, b, *, stride=1, padding=0, dilation=1, relu=False,
           out_dtype=jnp.bfloat16):
    if _direct_eligible(x, w, stride, padding, dilation):
        return _conv2d_direct(x, w, b, padding=padding, dilation=dilation,
                              relu=relu, out_dtype=out_dtype)
    return _conv2d_im2col(x, w, b, stride=stride, padding=padding,
                          dilation=dilation, relu=relu, out_dtype=out_dtype)


# --------------------------------------------------------------------------
# parameter construction (deterministic, He init).  Weights stored bf16
# (MXU operands), biases f32.
# --------------------------------------------------------------------------
def conv_params(key, kh, kw, cin, cout):
    w = jax.random.normal(key, (kh, kw, cin, cout), jnp.float32)
    w = (w * (2.0 / (kh * kw * cin)) ** 0.5).astype(jnp.bfloat16)
    b = jnp.zeros((cout,), jnp.float32)
    return w, b


def build_vgg(cfg, in_ch, ki):
    # Mirrors torchvision-style vgg() for SSD; ReLU slots kept as 'identity'
    # (ReLU is fused into the preceding conv kernel) so that the index
    # arithmetic in forward (range(23), ...) is preserved exactly.
    layers = []
    c = in_ch
    for v in cfg:
        if v == 'M':
            layers.append(('pool2', False))
        elif v == 'C':
            layers.append(('pool2', True))
        else:
            w, b = conv_params(next(ki), 3, 3, c, v)
            layers.append(('conv', dict(w=w, b=b, stride=1, pad=1, dil=1, relu=True)))
            layers.append(('identity',))
            c = v
    layers.append(('pool3',))                                   # pool5
    w, b = conv_params(next(ki), 3, 3, 512, 1024)               # conv6 (dilated)
    layers.append(('conv', dict(w=w, b=b, stride=1, pad=6, dil=6, relu=True)))
    layers.append(('identity',))
    w, b = conv_params(next(ki), 1, 1, 1024, 1024)              # conv7
    layers.append(('conv', dict(w=w, b=b, stride=1, pad=0, dil=1, relu=True)))
    layers.append(('identity',))
    return layers


def build_extras(cfg, in_ch, ki):
    layers = []
    flag = False
    c = in_ch
    for k, v in enumerate(cfg):
        if c != 'S':
            out_ch = cfg[k + 1] if v == 'S' else v
            ksz = (1, 3)[flag]
            stride = 2 if v == 'S' else 1
            pad = 1 if ksz == 3 else 0     # see TODO(synk) at top for stride-1 3x3
            w, b = conv_params(next(ki), ksz, ksz, c, out_ch)
            layers.append(dict(w=w, b=b, stride=stride, pad=pad))
            flag = not flag
        c = v
    return layers


def build_heads(source_channels, mbox, num_classes, ki):
    # loc and conf convs for one source are fused into a single conv
    # (concatenated output channels); output channels are then zero-padded up
    # to a multiple of 128 for lane-dense stores.  Padding sliced off outside.
    heads = []
    for c, m in zip(source_channels, mbox):
        wl, bl = conv_params(next(ki), 3, 3, c, m * 4)
        wc, bc = conv_params(next(ki), 3, 3, c, m * num_classes)
        total = m * 4 + m * num_classes
        cpad = _rup(total, 128)
        w = jnp.concatenate([wl, wc], axis=-1)
        b = jnp.concatenate([bl, bc], axis=0)
        if cpad != total:
            w = jnp.pad(w, ((0, 0), (0, 0), (0, 0), (0, cpad - total)))
            b = jnp.pad(b, (0, cpad - total))
        heads.append(dict(w=w, b=b, split=m * 4, total=total))
    return heads


def compute_feature_maps(size):
    s = size
    s = s // 2                      # pool1
    s = s // 2                      # pool2
    s = -(-s // 2)                  # pool3 (ceil_mode)
    fms = [s]                       # conv4_3
    s = s // 2                      # pool4
    fms.append(s)                   # conv7
    s = (s - 1) // 2 + 1            # extras (3x3, s2, p1)
    fms.append(s)
    s = (s - 1) // 2 + 1
    fms.append(s)
    fms.append(s)                   # extras 3x3 p1 s1 (spatial preserved)
    fms.append(s)
    return fms


def make_priors(size, fms, mbox):
    min_ratio, max_ratio = 0.15, 0.9
    n = len(fms)
    scales = [min_ratio + (max_ratio - min_ratio) * k / (n - 1) for k in range(n)]
    scales.append(1.0)
    boxes = []
    for k, f in enumerate(fms):
        step = size / f
        s_k = scales[k]
        s_k_prime = math.sqrt(scales[k] * scales[k + 1])
        ars = [2] if mbox[k] == 4 else [2, 3]
        for i in range(f):
            for j in range(f):
                cx = (j + 0.5) * step / size
                cy = (i + 0.5) * step / size
                boxes.append([cx, cy, s_k, s_k])
                boxes.append([cx, cy, s_k_prime, s_k_prime])
                for ar in ars:
                    r = math.sqrt(ar)
                    boxes.append([cx, cy, s_k * r, s_k / r])
                    boxes.append([cx, cy, s_k / r, s_k * r])
    return jnp.clip(jnp.asarray(boxes, dtype=jnp.float32), 0.0, 1.0)


def build_ssd_params(key, size, num_classes):
    ki = iter(jax.random.split(key, 64))
    vgg = build_vgg(BASE_300, 3, ki)
    extras = build_extras(EXTRAS_300, 1024, ki)
    source_channels = [512, 1024, 512, 256, 256, 256]
    heads = build_heads(source_channels, MBOX_300, num_classes, ki)
    fms = compute_feature_maps(size)
    return dict(vgg=vgg, extras=extras, heads=heads,
                l2norm_w=jnp.full((512,), 20.0, jnp.float32),
                priors=make_priors(size, fms, MBOX_300),
                feature_maps=fms, num_classes=num_classes)


# --------------------------------------------------------------------------
# SSD forward (train phase)
# --------------------------------------------------------------------------
def _apply_vgg_layer(layer, x):
    kind = layer[0]
    if kind == 'conv':
        p = layer[1]
        return conv2d(x, p['w'], p['b'], stride=p['stride'],
                      padding=p['pad'], dilation=p['dil'], relu=p['relu'])
    if kind == 'pool2':
        return max_pool_2x2(x, ceil_mode=layer[1])
    if kind == 'pool3':
        return max_pool_3x3_s1_p1(x)
    return x                                   # 'identity' (fused ReLU slot)


def ssd_forward(params, x_nchw):
    # NCHW -> NHWC and bf16 inter-layer activations.
    x = jnp.transpose(x_nchw, (0, 2, 3, 1)).astype(jnp.bfloat16)
    vgg = params['vgg']
    sources, loc, conf = [], [], []

    for k in range(23):                        # up to conv4_3 + ReLU
        x = _apply_vgg_layer(vgg[k], x)
    sources.append(l2norm(x, params['l2norm_w']))

    for k in range(23, len(vgg)):              # rest of VGG (conv7)
        x = _apply_vgg_layer(vgg[k], x)
    sources.append(x)

    for k, p in enumerate(params['extras']):   # F.relu fused into conv kernel
        x = conv2d(x, p['w'], p['b'], stride=p['stride'],
                   padding=p['pad'], dilation=1, relu=True)
        if k % 2 == 1:
            sources.append(x)

    for src, h in zip(sources, params['heads']):
        # one fused, lane-dense conv per source: [0:split) loc, [split:total) conf.
        # NHWC conv output already matches permute(0, 2, 3, 1).contiguous().
        y = conv2d(src, h['w'], h['b'], stride=1, padding=1,
                   out_dtype=jnp.float32)
        B = src.shape[0]
        loc.append(y[..., :h['split']].reshape(B, -1))
        conf.append(y[..., h['split']:h['total']].reshape(B, -1))

    loc = jnp.concatenate(loc, axis=1)
    conf = jnp.concatenate(conf, axis=1)
    B = loc.shape[0]
    # TODO(synk): test-phase Detect (decode + NMS) not implemented; train output only.
    return (loc.reshape(B, -1, 4),
            conf.reshape(B, -1, params['num_classes']),
            params['priors'])


# --------------------------------------------------------------------------
if __name__ == "__main__":
    key = jax.random.PRNGKey(0)
    k_in, k_param = jax.random.split(key)

    size, num_classes, batch = 64, 5, 2
    params = build_ssd_params(k_param, size, num_classes)
    x = jax.random.normal(k_in, (batch, 3, size, size), jnp.float32)

    loc, conf, priors = ssd_forward(params, x)
    for t in (loc, conf, priors):
        jax.block_until_ready(t)

    n_priors = sum(f * f * m for f, m in zip(params['feature_maps'], MBOX_300))
    assert loc.shape == (batch, n_priors, 4), loc.shape
    assert conf.shape == (batch, n_priors, num_classes), conf.shape
    assert priors.shape == (n_priors, 4), priors.shape
    assert bool(jnp.all(jnp.isfinite(loc))) and bool(jnp.all(jnp.isfinite(conf)))
    print("KERNEL_OK")
</pallas_src>

<mosaic_0001>
module attributes {stable_mosaic.version = 11 : i64} {
  func.func @_matmul_bias_kernel(%arg0: i32, %arg1: i32, %arg2: i32, %arg3: memref<256x27xbf16, #tpu.memory_space<vmem>>, %arg4: memref<27x64xbf16, #tpu.memory_space<vmem>>, %arg5: memref<1x64xf32, #tpu.memory_space<vmem>>, %arg6: memref<256x64xbf16, #tpu.memory_space<vmem>>, %arg7: memref<256x64xf32, #tpu.memory_space<vmem>>) attributes {dimension_semantics = [#tpu.dimension_semantics<parallel>, #tpu.dimension_semantics<parallel>, #tpu.dimension_semantics<arbitrary>], iteration_bounds = array<i64: 32, 1, 1>, scalar_prefetch = 0 : i64, scratch_operands = 1 : i64, tpu.core_type = #tpu.core_type<tc>, window_params = [{transform_indices = @transform_0, window_bounds = array<i64: 256, 27>}, {transform_indices = @transform_1, window_bounds = array<i64: 27, 64>}, {transform_indices = @transform_2, window_bounds = array<i64: 1, 64>}, {transform_indices = @transform_3, window_bounds = array<i64: 256, 64>}]} {
    %c0_i32 = arith.constant 0 : i32
    %0 = arith.cmpi eq, %arg2, %c0_i32 : i32
    %1 = arith.extui %0 : i1 to i32
    %c0_i32_0 = arith.constant 0 : i32
    %2 = arith.cmpi ne, %1, %c0_i32_0 : i32
    scf.if %2 {
      %c0_10 = arith.constant 0 : index
      %c0_11 = arith.constant 0 : index
      %12 = vector.load %arg5[%c0_10, %c0_11] : memref<1x64xf32, #tpu.memory_space<vmem>>, vector<1x64xf32>
      %13 = vector.shape_cast %12 : vector<1x64xf32> to vector<1x64xf32>
      %14 = vector.broadcast %13 : vector<1x64xf32> to vector<256x64xf32>
      %c0_12 = arith.constant 0 : index
      %c0_13 = arith.constant 0 : index
      %15 = vector.load %arg7[%c0_12, %c0_13] : memref<256x64xf32, #tpu.memory_space<vmem>>, vector<256x64xf32>
      tpu.vector_store %arg7[%c0_12, %c0_13], %14 {strides = array<i32>} : memref<256x64xf32, #tpu.memory_space<vmem>>, vector<256x64xf32>,
    } else {
    }
    %c0 = arith.constant 0 : index
    %c0_1 = arith.constant 0 : index
    %3 = vector.load %arg7[%c0, %c0_1] : memref<256x64xf32, #tpu.memory_space<vmem>>, vector<256x64xf32>
    %c0_2 = arith.constant 0 : index
    %c0_3 = arith.constant 0 : index
    %4 = vector.load %arg3[%c0_2, %c0_3] : memref<256x27xbf16, #tpu.memory_space<vmem>>, vector<256x27xbf16>
    %c0_4 = arith.constant 0 : index
    %c0_5 = arith.constant 0 : index
    %5 = vector.load %arg4[%c0_4, %c0_5] : memref<27x64xbf16, #tpu.memory_space<vmem>>, vector<27x64xbf16>
    %cst = arith.constant dense<0.000000e+00> : vector<256x64xf32>
    %6 = tpu.matmul %4, %5, %cst {dimension_numbers = #tpu.dot_dimension_numbers<[1], [0], [0], [1], [0, 0, 1, 1], [], []>} : vector<256x27xbf16>, vector<27x64xbf16>, vector<256x64xf32> -> vector<256x64xf32>
    %7 = arith.addf %3, %6 : vector<256x64xf32>
    %c0_6 = arith.constant 0 : index
    %c0_7 = arith.constant 0 : index
    %8 = vector.load %arg7[%c0_6, %c0_7] : memref<256x64xf32, #tpu.memory_space<vmem>>, vector<256x64xf32>
    tpu.vector_store %arg7[%c0_6, %c0_7], %7 {strides = array<i32>} : memref<256x64xf32, #tpu.memory_space<vmem>>, vector<256x64xf32>,
    %c0_i32_8 = arith.constant 0 : i32
    %9 = arith.cmpi eq, %arg2, %c0_i32_8 : i32
    %10 = arith.extui %9 : i1 to i32
    %c0_i32_9 = arith.constant 0 : i32
    %11 = arith.cmpi ne, %10, %c0_i32_9 : i32
    scf.if %11 {
      %c0_10 = arith.constant 0 : index
      %c0_11 = arith.constant 0 : index
      %12 = vector.load %arg7[%c0_10, %c0_11] : memref<256x64xf32, #tpu.memory_space<vmem>>, vector<256x64xf32>
      %cst_12 = arith.constant 0.000000e+00 : f32
      %13 = vector.broadcast %cst_12 : f32 to vector<256x64xf32>
      %14 = arith.maximumf %12, %13 : vector<256x64xf32>
      %15 = arith.truncf %14 : vector<256x64xf32> to vector<256x64xbf16>
      %c0_13 = arith.constant 0 : index
      %c0_14 = arith.constant 0 : index
      %16 = vector.load %arg6[%c0_13, %c0_14] : memref<256x64xbf16, #tpu.memory_space<vmem>>, vector<256x64xbf16>
      tpu.vector_store %arg6[%c0_13, %c0_14], %15 {strides = array<i32>} : memref<256x64xbf16, #tpu.memory_space<vmem>>, vector<256x64xbf16>,
    } else {
    }
    return
  }
  func.func @transform_0(%arg0: i32, %arg1: i32, %arg2: i32) -> (i32, i32) {
    %c0_i32 = arith.constant 0 : i32
    return %arg0, %arg2 : i32, i32
  }
  func.func @transform_1(%arg0: i32, %arg1: i32, %arg2: i32) -> (i32, i32) {
    %c0_i32 = arith.constant 0 : i32
    return %arg2, %arg1 : i32, i32
  }
  func.func @transform_2(%arg0: i32, %arg1: i32, %arg2: i32) -> (i32, i32) {
    %c0_i32 = arith.constant 0 : i32
    %c0_i32_0 = arith.constant 0 : i32
    return %c0_i32, %arg1 : i32, i32
  }
  func.func @transform_3(%arg0: i32, %arg1: i32, %arg2: i32) -> (i32, i32) {
    %c0_i32 = arith.constant 0 : i32
    return %arg0, %arg1 : i32, i32
  }
}

</mosaic_0001>

<llo_original>
// kernel: tpu_custom_call.1
$region0: #{tpu_custom_call.1}
  #allocation0 [shape = 'u32[]', space=smem, size = 0x4, offset = 0x4, fixed_abs, tag = 'smem constant byte address 0x4 - core index']
  #allocation1 [shape = 'u32[72,128]{1,0:T(1,128)}', space=vmem, size = 0x9000, scoped, tag = 'internal scratch']
  #allocation2 [shape = 'f32[256,64]{1,0:T(8,128)}', space=vmem, size = 0x20000, scoped, tag = 'scratch operand']
  %s0 = inlined_call_operand.vmem [shape: bf16[8192,27], index: 0, kind: input, shape index: {}]
  %s1 = inlined_call_operand.vmem [shape: bf16[27,64], index: 1, kind: input, shape index: {}]
  %s2 = inlined_call_operand.vmem [shape: f32[1,64], index: 2, kind: input, shape index: {}]
  %s3 = inlined_call_operand.vmem [shape: bf16[8192,64], index: 3, kind: output, shape index: {}]
  %s4 = sld [smem:[#allocation0]]
  $region53: #{tpu_custom_call.1} parent=0
    _
  %s6 = ssub.s32 1, %s4
  %s7 = scalar_select 0, %s6, %s4
  loop: start=0, step=1, limit=34
  $region2: #{tpu_custom_call.1} parent=0 // loop_pre_header
    _
  $region3: #{tpu_custom_call.1} parent=0 // loop_header
    %s9 = sphi 0, %s13
    %p10 = scmp.ge.s32.totalorder %s9, 34
    %s16 = sphi 0, %s35
    %s17 = sphi 0, %s31
    %s18 = sphi 0, %s27
    %s19 = sphi 0, %s16
    %s20 = sphi 0, %s17
    %s21 = sphi 0, %s18
    %s22 = sphi 0, %s19
    %s23 = sphi 0, %s20
    %s24 = sphi 0, %s21
    %s40 = sphi 0, %s42
    %s43 = sphi 0, %s40
    %s44 = sphi 0, %s43
    %s60 = sphi 0, %s44
    %s68 = sphi 0, %s70
    %s71 = sphi 0, %s68
    %s72 = sphi 0, %s71
    %s88 = sphi 0, %s72
    %s94 = sphi 0, %s96
    %s97 = sphi 0, %s94
    %s98 = sphi 0, %s97
    %s114 = sphi 0, %s98
    %s122 = sphi 0, %s124
    %s125 = sphi 0, %s122
    %s126 = sphi 0, %s125
    %s142 = sphi 0, %s126
  $region4: #{tpu_custom_call.1} parent=0 // loop_header_branch
    %12 = sbr.rel (%p10) target = $region8
  $region5: #{tpu_custom_call.1} parent=0 // loop_body
    %s14 = ssub.s32 %s9, 1
    %s15 = ssub.s32 %s9, 2
    %s25 = sadd.s32 1, %s18
    %p26 = scmp.ge.s32.totalorder %s25, 1
    %s27 = scalar_select %p26, 0, %s25
    %s28 = sadd.s32 1, %s17
    %s29 = scalar_select %p26, %s28, %s17
    %p30 = scmp.ge.s32.totalorder %s29, 1
    %s31 = scalar_select %p30, 0, %s29
    %s32 = sadd.s32 1, %s16
    %s33 = scalar_select %p30, %s32, %s16
    %p34 = scmp.ge.s32.totalorder %s33, 32
    %s35 = scalar_select %p34, 0, %s33
    %s36 = ssub.s32 %s16, %s35
    %s37 = ssub.s32 %s18, %s27
    %s38 = sor.u32 %s36, %s37
    %p39 = scmp.eq.s32.totalorder %s38, 0
    %s41 = sadd.s32 %s40, 1
    %s42 = scalar_select %p39, %s40, %s41
    %p45 = pneg %p39
    %p46 = scmp.eq.s32.totalorder %s9, 31
    %p47 = por %p45, %p46
    %p48 = scmp.ne.s32.totalorder %s40, %s43
    %p49 = scmp.eq.s32.totalorder %s9, 0
    %p50 = por %p48, %p49
    %p51 = scmp.ne.s32.totalorder %s40, %s43
    %p52 = scmp.eq.s32.totalorder %s14, 31
    %p53 = por %p51, %p52
    %p54 = scmp.ne.s32.totalorder %s43, %s44
    %p55 = scmp.eq.s32.totalorder %s14, 0
    %p56 = por %p54, %p55
    %p57 = scmp.ne.s32.totalorder %s43, %s44
    %p58 = scmp.eq.s32.totalorder %s15, 31
    %p59 = por %p57, %p58
    %p61 = scmp.ne.s32.totalorder %s44, %s60
    %p62 = scmp.eq.s32.totalorder %s15, 0
    %p63 = por %p61, %p62
    %s64 = ssub.s32 %s18, %s27
    %s65 = ssub.s32 %s17, %s31
    %s66 = sor.u32 %s64, %s65
    %p67 = scmp.eq.s32.totalorder %s66, 0
    %s69 = sadd.s32 %s68, 1
    %s70 = scalar_select %p67, %s68, %s69
    %p73 = pneg %p67
    %p74 = scmp.eq.s32.totalorder %s9, 31
    %p75 = por %p73, %p74
    %p76 = scmp.ne.s32.totalorder %s68, %s71
    %p77 = scmp.eq.s32.totalorder %s9, 0
    %p78 = por %p76, %p77
    %p79 = scmp.ne.s32.totalorder %s68, %s71
    %p80 = scmp.eq.s32.totalorder %s14, 31
    %p81 = por %p79, %p80
    %p82 = scmp.ne.s32.totalorder %s71, %s72
    %p83 = scmp.eq.s32.totalorder %s14, 0
    %p84 = por %p82, %p83
    %p85 = scmp.ne.s32.totalorder %s71, %s72
    %p86 = scmp.eq.s32.totalorder %s15, 31
    %p87 = por %p85, %p86
    %p89 = scmp.ne.s32.totalorder %s72, %s88
    %p90 = scmp.eq.s32.totalorder %s15, 0
    %p91 = por %p89, %p90
    %s92 = ssub.s32 %s17, %s31
    %p93 = scmp.eq.s32.totalorder %s92, 0
    %s95 = sadd.s32 %s94, 1
    %s96 = scalar_select %p93, %s94, %s95
    %p99 = pneg %p93
    %p100 = scmp.eq.s32.totalorder %s9, 31
    %p101 = por %p99, %p100
    %p102 = scmp.ne.s32.totalorder %s94, %s97
    %p103 = scmp.eq.s32.totalorder %s9, 0
    %p104 = por %p102, %p103
    %p105 = scmp.ne.s32.totalorder %s94, %s97
    %p106 = scmp.eq.s32.totalorder %s14, 31
    %p107 = por %p105, %p106
    %p108 = scmp.ne.s32.totalorder %s97, %s98
    %p109 = scmp.eq.s32.totalorder %s14, 0
    %p110 = por %p108, %p109
    %p111 = scmp.ne.s32.totalorder %s97, %s98
    %p112 = scmp.eq.s32.totalorder %s15, 31
    %p113 = por %p111, %p112
    %p115 = scmp.ne.s32.totalorder %s98, %s114
    %p116 = scmp.eq.s32.totalorder %s15, 0
    %p117 = por %p115, %p116
    %s118 = ssub.s32 %s16, %s35
    %s119 = ssub.s32 %s17, %s31
    %s120 = sor.u32 %s118, %s119
    %p121 = scmp.eq.s32.totalorder %s120, 0
    %s123 = sadd.s32 %s122, 1
    %s124 = scalar_select %p121, %s122, %s123
    %p127 = pneg %p121
    %p128 = scmp.eq.s32.totalorder %s9, 31
    %p129 = por %p127, %p128
    %p130 = scmp.ne.s32.totalorder %s122, %s125
    %p131 = scmp.eq.s32.totalorder %s9, 0
    %p132 = por %p130, %p131
    %p133 = scmp.ne.s32.totalorder %s122, %s125
    %p134 = scmp.eq.s32.totalorder %s14, 31
    %p135 = por %p133, %p134
    %p136 = scmp.ne.s32.totalorder %s125, %s126
    %p137 = scmp.eq.s32.totalorder %s14, 0
    %p138 = por %p136, %p137
    %p139 = scmp.ne.s32.totalorder %s125, %s126
    %p140 = scmp.eq.s32.totalorder %s15, 31
    %p141 = por %p139, %p140
    %p143 = scmp.ne.s32.totalorder %s126, %s142
    %p144 = scmp.eq.s32.totalorder %s15, 0
    %p145 = por %p143, %p144
    %p146 = scmp.le.s32.totalorder 1, %s9
    %p147 = scmp.lt.s32.totalorder %s9, 33
    %p148 = pnand %p146, %p147
    %p149 = pneg %p148
    // Predicated region
    $region9: #{tpu_custom_call.1} parent=5 // pred_check
      _
    $region10: #{tpu_custom_call.1} parent=5 // pred_check_branch
      %151 = sbr.rel (%p148) target = $region12
    $region11: #{tpu_custom_call.1} parent=5 // pred_region
      %s152 = ssub.s32 %s9, 1
      // Predicated region
      $region13: #{tpu_custom_call.1} parent=11 // pred_check
        %p153 = pneg %p84
      $region14: #{tpu_custom_call.1} parent=11 // pred_check_branch
        %155 = sbr.rel (%p153) target = $region16
      $region15: #{tpu_custom_call.1} parent=11 // pred_region
        %s156 = smul.u32 4, %s21
        %p157 = scmp.lt.s32.totalorder %s156, 3
        %s158 = scalar_select %p157, %s156, 3
        %p159 = scmp.lt.s32.totalorder %s20, 0
        %s160 = scalar_select %p159, %s20, 0
        %s161 = sadd.s32 %s160, %s158
        %s162 = smul.addr %s161, 4
        %s163 = scalar_lea.vmem %s1, %s162
        %s164 = smul.u32 4, %s21
      $region16: #{tpu_custom_call.1} parent=11 // pred_fallthru
        _
      // Predicated region
      $region17: #{tpu_custom_call.1} parent=11 // pred_check
        %p165 = pneg %p110
      $region18: #{tpu_custom_call.1} parent=11 // pred_check_branch
        %167 = sbr.rel (%p165) target = $region20
      $region19: #{tpu_custom_call.1} parent=11 // pred_region
        %p168 = scmp.lt.s32.totalorder %s20, 0
        %s169 = scalar_select %p168, %s20, 0
        %s170 = scalar_lea.vmem %s2, %s169
      $region20: #{tpu_custom_call.1} parent=11 // pred_fallthru
        _
    $region12: #{tpu_custom_call.1} parent=5 // pred_fallthru
      _
    %p171 = scmp.lt.s32.totalorder %s9, 32
    // Predicated region
    $region21: #{tpu_custom_call.1} parent=5 // pred_check
      %p172 = pneg %p171
    $region22: #{tpu_custom_call.1} parent=5 // pred_check_branch
      %174 = sbr.rel (%p172) target = $region24
    $region23: #{tpu_custom_call.1} parent=5 // pred_region
      // Predicated region
      $region25: #{tpu_custom_call.1} parent=23 // pred_check
        %p175 = pneg %p50
      $region26: #{tpu_custom_call.1} parent=23 // pred_check_branch
        %177 = sbr.rel (%p175) target = $region28
      $region27: #{tpu_custom_call.1} parent=23 // pred_region
        %s178 = smul.u32 32, %s16
        %p179 = scmp.lt.s32.totalorder %s178, 1023
        %s180 = scalar_select %p179, %s178, 1023
        %p181 = scmp.lt.s32.totalorder %s18, 0
        %s182 = scalar_select %p181, %s18, 0
        %s183 = sadd.s32 %s182, %s180
        %s184 = smul.addr %s183, 4
        %s185 = scalar_lea.vmem %s0, %s184
        %s186 = smul.u32 32, %s16
      $region28: #{tpu_custom_call.1} parent=23 // pred_fallthru
        _
    $region24: #{tpu_custom_call.1} parent=5 // pred_fallthru
      _
    %p187 = scmp.le.s32.totalorder 1, %s9
    %p188 = scmp.lt.s32.totalorder %s9, 33
    %p189 = pnand %p187, %p188
    %p190 = pneg %p189
    // Predicated region
    $region29: #{tpu_custom_call.1} parent=5 // pred_check
      _
    $region30: #{tpu_custom_call.1} parent=5 // pred_check_branch
      %192 = sbr.rel (%p189) target = $region32
    $region31: #{tpu_custom_call.1} parent=5 // pred_region
      %s193 = ssub.s32 %s9, 1
      %s194 = smul.u32 32, %s19
      %p195 = scmp.lt.s32.totalorder %s194, 1023
      %s196 = scalar_select %p195, %s194, 1023
      %p197 = scmp.lt.s32.totalorder %s21, 0
      %s198 = scalar_select %p197, %s21, 0
      %s199 = sadd.s32 %s198, %s196
      %s200 = smul.addr %s199, 4
      %s201 = scalar_lea.vmem %s0, %s200
      %p202 = pneg %p56
      %p203 = pneg %p53
      %s204 = smul.u32 4, %s21
      %p205 = scmp.lt.s32.totalorder %s204, 3
      %s206 = scalar_select %p205, %s204, 3
      %p207 = scmp.lt.s32.totalorder %s20, 0
      %s208 = scalar_select %p207, %s20, 0
      %s209 = sadd.s32 %s208, %s206
      %s210 = smul.addr %s209, 4
      %s211 = scalar_lea.vmem %s1, %s210
      %p212 = pneg %p84
      %p213 = pneg %p81
      %p214 = scmp.lt.s32.totalorder %s20, 0
      %s215 = scalar_select %p214, %s20, 0
      %s216 = scalar_lea.vmem %s2, %s215
      %p217 = pneg %p110
      %p218 = pneg %p107
      %p219 = pneg %p138
      %p220 = pneg %p135
      %s221 = smul.u32 32, %s19
      %p222 = scmp.lt.s32.totalorder %s221, 1023
      %s223 = scalar_select %p222, %s221, 1023
      %p224 = scmp.lt.s32.totalorder %s20, 0
      %s225 = scalar_select %p224, %s20, 0
      %s226 = sadd.s32 %s225, %s223
      %s227 = smul.addr %s226, 4
      %s228 = scalar_lea.vmem %s3, %s227
      %s229 = smul.u32 32, %s19
      %p230 = scmp.lt.s32.totalorder %s229, 1023
      %s231 = scalar_select %p230, %s229, 1023
      %p232 = scmp.lt.s32.totalorder %s21, 0
      %s233 = scalar_select %p232, %s21, 0
      %s234 = sadd.s32 %s233, %s231
      %s235 = smul.addr %s234, 4
      %s236 = scalar_lea.vmem %s0, %s235
      %s237 = smul.u32 32, %s19
      %s238 = smul.u32 4, %s21
      %p239 = scmp.lt.s32.totalorder %s238, 3
      %s240 = scalar_select %p239, %s238, 3
      %p241 = scmp.lt.s32.totalorder %s20, 0
      %s242 = scalar_select %p241, %s20, 0
      %s243 = sadd.s32 %s242, %s240
      %s244 = smul.addr %s243, 4
      %s245 = scalar_lea.vmem %s1, %s244
      %s246 = smul.u32 4, %s21
      %p247 = scmp.lt.s32.totalorder %s20, 0
      %s248 = scalar_select %p247, %s20, 0
      %s249 = scalar_lea.vmem %s2, %s248
      %s250 = smul.u32 32, %s19
      %p251 = scmp.lt.s32.totalorder %s250, 1023
      %s252 = scalar_select %p251, %s250, 1023
      %p253 = scmp.lt.s32.totalorder %s20, 0
      %s254 = scalar_select %p253, %s20, 0
      %s255 = sadd.s32 %s254, %s252
      %s256 = smul.addr %s255, 4
      %s257 = scalar_lea.vmem %s3, %s256
      %s258 = smul.u32 32, %s19
      %p260 = scmp.eq.s32.totalorder %s21, 0
      // Predicated region
      $region33: #{tpu_custom_call.1} parent=31 // pred_check
        %p261 = pneg %p260
      $region34: #{tpu_custom_call.1} parent=31 // pred_check_branch
        %263 = sbr.rel (%p261) target = $region36
      $region35: #{tpu_custom_call.1} parent=31 // pred_region
        %v264 = vld [vmem:[%s249] sm:$0x1]
        %v266 = vperm.slane %v264, 0
        %vm268 = vcmask 523264
        %269 = vst.msk [vmem:[#allocation2] sm:$0xff] %vm268, %v266
        %270 = vst.msk [vmem:[#allocation2 + $0x8] sm:$0xff] %vm268, %v266
        %271 = vst.msk [vmem:[#allocation2 + $0x10] sm:$0xff] %vm268, %v266
        %272 = vst.msk [vmem:[#allocation2 + $0x18] sm:$0xff] %vm268, %v266
        %273 = vst.msk [vmem:[#allocation2 + $0x20] sm:$0xff] %vm268, %v266
        %274 = vst.msk [vmem:[#allocation2 + $0x28] sm:$0xff] %vm268, %v266
        %275 = vst.msk [vmem:[#allocation2 + $0x30] sm:$0xff] %vm268, %v266
        %276 = vst.msk [vmem:[#allocation2 + $0x38] sm:$0xff] %vm268, %v266
        %277 = vst.msk [vmem:[#allocation2 + $0x40] sm:$0xff] %vm268, %v266
        %278 = vst.msk [vmem:[#allocation2 + $0x48] sm:$0xff] %vm268, %v266
        %279 = vst.msk [vmem:[#allocation2 + $0x50] sm:$0xff] %vm268, %v266
        %280 = vst.msk [vmem:[#allocation2 + $0x58] sm:$0xff] %vm268, %v266
        %281 = vst.msk [vmem:[#allocation2 + $0x60] sm:$0xff] %vm268, %v266
        %282 = vst.msk [vmem:[#allocation2 + $0x68] sm:$0xff] %vm268, %v266
        %283 = vst.msk [vmem:[#allocation2 + $0x70] sm:$0xff] %vm268, %v266
        %284 = vst.msk [vmem:[#allocation2 + $0x78] sm:$0xff] %vm268, %v266
        %285 = vst.msk [vmem:[#allocation2 + $0x80] sm:$0xff] %vm268, %v266
        %286 = vst.msk [vmem:[#allocation2 + $0x88] sm:$0xff] %vm268, %v266
        %287 = vst.msk [vmem:[#allocation2 + $0x90] sm:$0xff] %vm268, %v266
        %288 = vst.msk [vmem:[#allocation2 + $0x98] sm:$0xff] %vm268, %v266
        %289 = vst.msk [vmem:[#allocation2 + $0xa0] sm:$0xff] %vm268, %v266
        %290 = vst.msk [vmem:[#allocation2 + $0xa8] sm:$0xff] %vm268, %v266
        %291 = vst.msk [vmem:[#allocation2 + $0xb0] sm:$0xff] %vm268, %v266
        %292 = vst.msk [vmem:[#allocation2 + $0xb8] sm:$0xff] %vm268, %v266
        %293 = vst.msk [vmem:[#allocation2 + $0xc0] sm:$0xff] %vm268, %v266
        %294 = vst.msk [vmem:[#allocation2 + $0xc8] sm:$0xff] %vm268, %v266
        %295 = vst.msk [vmem:[#allocation2 + $0xd0] sm:$0xff] %vm268, %v266
        %296 = vst.msk [vmem:[#allocation2 + $0xd8] sm:$0xff] %vm268, %v266
        %297 = vst.msk [vmem:[#allocation2 + $0xe0] sm:$0xff] %vm268, %v266
        %298 = vst.msk [vmem:[#allocation2 + $0xe8] sm:$0xff] %vm268, %v266
        %299 = vst.msk [vmem:[#allocation2 + $0xf0] sm:$0xff] %vm268, %v266
        %300 = vst.msk [vmem:[#allocation2 + $0xf8] sm:$0xff] %vm268, %v266
      $region36: #{tpu_custom_call.1} parent=31 // pred_fallthru
        _
      %v301 = vld [vmem:[#allocation2] sm:$0xff]
      %v302 = vld [vmem:[#allocation2 + $0x8] sm:$0xff]
      %v303 = vld [vmem:[#allocation2 + $0x10] sm:$0xff]
      %v304 = vld [vmem:[#allocation2 + $0x18] sm:$0xff]
      %v305 = vld [vmem:[#allocation2 + $0x20] sm:$0xff]
      %v306 = vld [vmem:[#allocation2 + $0x28] sm:$0xff]
      %v307 = vld [vmem:[#allocation2 + $0x30] sm:$0xff]
      %v308 = vld [vmem:[#allocation2 + $0x38] sm:$0xff]
      %v309 = vld [vmem:[#allocation2 + $0x40] sm:$0xff]
      %v310 = vld [vmem:[#allocation2 + $0x48] sm:$0xff]
      %v311 = vld [vmem:[#allocation2 + $0x50] sm:$0xff]
      %v312 = vld [vmem:[#allocation2 + $0x58] sm:$0xff]
      %v313 = vld [vmem:[#allocation2 + $0x60] sm:$0xff]
      %v314 = vld [vmem:[#allocation2 + $0x68] sm:$0xff]
      %v315 = vld [vmem:[#allocation2 + $0x70] sm:$0xff]
      %v316 = vld [vmem:[#allocation2 + $0x78] sm:$0xff]
      %v317 = vld [vmem:[#allocation2 + $0x80] sm:$0xff]
      %v318 = vld [vmem:[#allocation2 + $0x88] sm:$0xff]
      %v319 = vld [vmem:[#allocation2 + $0x90] sm:$0xff]
      %v320 = vld [vmem:[#allocation2 + $0x98] sm:$0xff]
      %v321 = vld [vmem:[#allocation2 + $0xa0] sm:$0xff]
      %v322 = vld [vmem:[#allocation2 + $0xa8] sm:$0xff]
      %v323 = vld [vmem:[#allocation2 + $0xb0] sm:$0xff]
      %v324 = vld [vmem:[#allocation2 + $0xb8] sm:$0xff]
      %v325 = vld [vmem:[#allocation2 + $0xc0] sm:$0xff]
      %v326 = vld [vmem:[#allocation2 + $0xc8] sm:$0xff]
      %v327 = vld [vmem:[#allocation2 + $0xd0] sm:$0xff]
      %v328 = vld [vmem:[#allocation2 + $0xd8] sm:$0xff]
      %v329 = vld [vmem:[#allocation2 + $0xe0] sm:$0xff]
      %v330 = vld [vmem:[#allocation2 + $0xe8] sm:$0xff]
      %v331 = vld [vmem:[#allocation2 + $0xf0] sm:$0xff]
      %v332 = vld [vmem:[#allocation2 + $0xf8] sm:$0xff]
      %v333 = vld [vmem:[%s236] sm:$0xf]
      %v334 = vld [vmem:[%s236 + $0x4] sm:$0xf]
      %v335 = vld [vmem:[%s236 + $0x8] sm:$0xf]
      %v336 = vld [vmem:[%s236 + $0xc] sm:$0xf]
      %v337 = vld [vmem:[%s236 + $0x10] sm:$0xf]
      %v338 = vld [vmem:[%s236 + $0x14] sm:$0xf]
      %v339 = vld [vmem:[%s236 + $0x18] sm:$0xf]
      %v340 = vld [vmem:[%s236 + $0x1c] sm:$0xf]
      %v341 = vld [vmem:[%s236 + $0x20] sm:$0xf]
      %v342 = vld [vmem:[%s236 + $0x24] sm:$0xf]
      %v343 = vld [vmem:[%s236 + $0x28] sm:$0xf]
      %v344 = vld [vmem:[%s236 + $0x2c] sm:$0xf]
      %v345 = vld [vmem:[%s236 + $0x30] sm:$0xf]
      %v346 = vld [vmem:[%s236 + $0x34] sm:$0xf]
      %v347 = vld [vmem:[%s236 + $0x38] sm:$0xf]
      %v348 = vld [vmem:[%s236 + $0x3c] sm:$0xf]
      %v349 = vld [vmem:[%s236 + $0x40] sm:$0xf]
      %v350 = vld [vmem:[%s236 + $0x44] sm:$0xf]
      %v351 = vld [vmem:[%s236 + $0x48] sm:$0xf]
      %v352 = vld [vmem:[%s236 + $0x4c] sm:$0xf]
      %v353 = vld [vmem:[%s236 + $0x50] sm:$0xf]
      %v354 = vld [vmem:[%s236 + $0x54] sm:$0xf]
      %v355 = vld [vmem:[%s236 + $0x58] sm:$0xf]
      %v356 = vld [vmem:[%s236 + $0x5c] sm:$0xf]
      %v357 = vld [vmem:[%s236 + $0x60] sm:$0xf]
      %v358 = vld [vmem:[%s236 + $0x64] sm:$0xf]
      %v359 = vld [vmem:[%s236 + $0x68] sm:$0xf]
      %v360 = vld [vmem:[%s236 + $0x6c] sm:$0xf]
      %v361 = vld [vmem:[%s236 + $0x70] sm:$0xf]
      %v362 = vld [vmem:[%s236 + $0x74] sm:$0xf]
      %v363 = vld [vmem:[%s236 + $0x78] sm:$0xf]
      %v364 = vld [vmem:[%s236 + $0x7c] sm:$0xf]
      %v365 = vld [vmem:[%s245] sm:$0xf]
      %v366 = vld [vmem:[%s245 + $0x4] sm:$0xf]
      %v367 = vld [vmem:[%s245 + $0x8] sm:$0xf]
      %v368 = vld [vmem:[%s245 + $0xc] sm:$0x3]
      %v401 = vunpack.c.l.b16 %v333
      %v402 = vunpack.c.l.b16 %v334
      %v403 = vunpack.c.l.b16 %v335
      %v404 = vunpack.c.l.b16 %v336
      %v405 = vunpack.c.l.b16 %v337
      %v406 = vunpack.c.l.b16 %v338
      %v407 = vunpack.c.l.b16 %v339
      %v408 = vunpack.c.l.b16 %v340
      %v409 = vunpack.c.l.b16 %v341
      %v410 = vunpack.c.l.b16 %v342
      %v411 = vunpack.c.l.b16 %v343
      %v412 = vunpack.c.l.b16 %v344
      %v413 = vunpack.c.l.b16 %v345
      %v414 = vunpack.c.l.b16 %v346
      %v415 = vunpack.c.l.b16 %v347
      %v416 = vunpack.c.l.b16 %v348
      %v417 = vunpack.c.l.b16 %v349
      %v418 = vunpack.c.l.b16 %v350
      %v419 = vunpack.c.l.b16 %v351
      %v420 = vunpack.c.l.b16 %v352
      %v421 = vunpack.c.l.b16 %v353
      %v422 = vunpack.c.l.b16 %v354
      %v423 = vunpack.c.l.b16 %v355
      %v424 = vunpack.c.l.b16 %v356
      %v425 = vunpack.c.l.b16 %v357
      %v426 = vunpack.c.l.b16 %v358
      %v427 = vunpack.c.l.b16 %v359
      %v428 = vunpack.c.l.b16 %v360
      %v429 = vunpack.c.l.b16 %v361
      %v430 = vunpack.c.l.b16 %v362
      %v431 = vunpack.c.l.b16 %v363
      %v432 = vunpack.c.l.b16 %v364
      %v433 = vpack.c.b16 %v402, %v401
      %v434 = vpack.c.b16 %v404, %v403
      %v435 = vpack.c.b16 %v406, %v405
      %v436 = vpack.c.b16 %v408, %v407
      %v437 = vpack.c.b16 %v410, %v409
      %v438 = vpack.c.b16 %v412, %v411
      %v439 = vpack.c.b16 %v414, %v413
      %v440 = vpack.c.b16 %v416, %v415
      %v441 = vpack.c.b16 %v418, %v417
      %v442 = vpack.c.b16 %v420, %v419
      %v443 = vpack.c.b16 %v422, %v421
      %v444 = vpack.c.b16 %v424, %v423
      %v445 = vpack.c.b16 %v426, %v425
      %v446 = vpack.c.b16 %v428, %v427
      %v447 = vpack.c.b16 %v430, %v429
      %v448 = vpack.c.b16 %v432, %v431
      %v453 = vunpack.c.l.b16 %v365
      %v454 = vunpack.c.l.b16 %v366
      %v455 = vunpack.c.l.b16 %v367
      %v456 = vunpack.c.l.b16 %v368
      %v457 = vpack.c.b16 %v454, %v453
      %v458 = vpack.c.b16 %v456, %v455
      %vm460 = vcmask 220160
      %v462 = vsel %vm460, %v433, 0
      %v465 = vsel %vm460, %v434, 0
      %v468 = vsel %vm460, %v435, 0
      %v471 = vsel %vm460, %v436, 0
      %v474 = vsel %vm460, %v437, 0
      %v477 = vsel %vm460, %v438, 0
      %v480 = vsel %vm460, %v439, 0
      %v483 = vsel %vm460, %v440, 0
      %v486 = vsel %vm460, %v441, 0
      %v489 = vsel %vm460, %v442, 0
      %v492 = vsel %vm460, %v443, 0
      %v495 = vsel %vm460, %v444, 0
      %v498 = vsel %vm460, %v445, 0
      %v501 = vsel %vm460, %v446, 0
      %v504 = vsel %vm460, %v447, 0
      %v507 = vsel %vm460, %v448, 0
      %vm509 = vcmask 1044480
      %vm510 = vcmask 1045504
      %v511 = vsel %vm509, 4294967295, 65535
      %v512 = vsel %vm510, %v511, 0
      %v514 = vand.u32 %v458, %v512
      %516 = vmatpush.bf16.msra.mxu0 0
      %517 = vmatpush.bf16.msra.mxu0 0
      %518 = vmatpush.bf16.msra.mxu0 0
      %519 = vmatpush.bf16.msra.mxu0 0
      %520 = vmatpush.bf16.msra.mxu0 0
      %521 = vmatpush.bf16.msra.mxu0 0
      %522 = vmatpush.bf16.msra.mxu0 %v514
      %523 = vmatpush.bf16.msra.mxu0 %v457
      %524 = vmatmul.bf16.gmra.mxu0 %v462
      %v525 = vpop.f32.mrf.mxu0
      %v526 = vadd.f32 0.0, %v525
      %v527 = vpop.f32.mrf.mxu0
      %v528 = vadd.f32 0.0, %v527
      %529 = vmatmul.bf16.gmra.mxu0 %v465
      %v530 = vpop.f32.mrf.mxu0
      %v531 = vadd.f32 0.0, %v530
      %v532 = vpop.f32.mrf.mxu0
      %v533 = vadd.f32 0.0, %v532
      %534 = vmatmul.bf16.gmra.mxu0 %v468
      %v535 = vpop.f32.mrf.mxu0
      %v536 = vadd.f32 0.0, %v535
      %v537 = vpop.f32.mrf.mxu0
      %v538 = vadd.f32 0.0, %v537
      %539 = vmatmul.bf16.gmra.mxu0 %v471
      %v540 = vpop.f32.mrf.mxu0
      %v541 = vadd.f32 0.0, %v540
      %v542 = vpop.f32.mrf.mxu0
      %v543 = vadd.f32 0.0, %v542
      %544 = vmatmul.bf16.gmra.mxu0 %v474
      %v545 = vpop.f32.mrf.mxu0
      %v546 = vadd.f32 0.0, %v545
      %v547 = vpop.f32.mrf.mxu0
      %v548 = vadd.f32 0.0, %v547
      %549 = vmatmul.bf16.gmra.mxu0 %v477
      %v550 = vpop.f32.mrf.mxu0
      %v551 = vadd.f32 0.0, %v550
      %v552 = vpop.f32.mrf.mxu0
      %v553 = vadd.f32 0.0, %v552
      %554 = vmatmul.bf16.gmra.mxu0 %v480
      %v555 = vpop.f32.mrf.mxu0
      %v556 = vadd.f32 0.0, %v555
      %v557 = vpop.f32.mrf.mxu0
      %v558 = vadd.f32 0.0, %v557
      %559 = vmatmul.bf16.gmra.mxu0 %v483
      %v560 = vpop.f32.mrf.mxu0
      %v561 = vadd.f32 0.0, %v560
      %v562 = vpop.f32.mrf.mxu0
      %v563 = vadd.f32 0.0, %v562
      %564 = vmatmul.bf16.gmra.mxu0 %v486
      %v565 = vpop.f32.mrf.mxu0
      %v566 = vadd.f32 0.0, %v565
      %v567 = vpop.f32.mrf.mxu0
      %v568 = vadd.f32 0.0, %v567
      %569 = vmatmul.bf16.gmra.mxu0 %v489
      %v570 = vpop.f32.mrf.mxu0
      %v571 = vadd.f32 0.0, %v570
      %v572 = vpop.f32.mrf.mxu0
      %v573 = vadd.f32 0.0, %v572
      %574 = vmatmul.bf16.gmra.mxu0 %v492
      %v575 = vpop.f32.mrf.mxu0
      %v576 = vadd.f32 0.0, %v575
      %v577 = vpop.f32.mrf.mxu0
      %v578 = vadd.f32 0.0, %v577
      %579 = vmatmul.bf16.gmra.mxu0 %v495
      %v580 = vpop.f32.mrf.mxu0
      %v581 = vadd.f32 0.0, %v580
      %v582 = vpop.f32.mrf.mxu0
      %v583 = vadd.f32 0.0, %v582
      %584 = vmatmul.bf16.gmra.mxu0 %v498
      %v585 = vpop.f32.mrf.mxu0
      %v586 = vadd.f32 0.0, %v585
      %v587 = vpop.f32.mrf.mxu0
      %v588 = vadd.f32 0.0, %v587
      %589 = vmatmul.bf16.gmra.mxu0 %v501
      %v590 = vpop.f32.mrf.mxu0
      %v591 = vadd.f32 0.0, %v590
      %v592 = vpop.f32.mrf.mxu0
      %v593 = vadd.f32 0.0, %v592
      %594 = vmatmul.bf16.gmra.mxu0 %v504
      %v595 = vpop.f32.mrf.mxu0
      %v596 = vadd.f32 0.0, %v595
      %v597 = vpop.f32.mrf.mxu0
      %v598 = vadd.f32 0.0, %v597
      %599 = vmatmul.bf16.gmra.mxu0 %v507
      %v600 = vpop.f32.mrf.mxu0
      %v601 = vadd.f32 0.0, %v600
      %v602 = vpop.f32.mrf.mxu0
      %v603 = vadd.f32 0.0, %v602
      %604 = vdwg.mxu0
      %v605 = vadd.f32 %v301, %v526
      %v606 = vadd.f32 %v302, %v528
      %v607 = vadd.f32 %v303, %v531
      %v608 = vadd.f32 %v304, %v533
      %v609 = vadd.f32 %v305, %v536
      %v610 = vadd.f32 %v306, %v538
      %v611 = vadd.f32 %v307, %v541
      %v612 = vadd.f32 %v308, %v543
      %v613 = vadd.f32 %v309, %v546
      %v614 = vadd.f32 %v310, %v548
      %v615 = vadd.f32 %v311, %v551
      %v616 = vadd.f32 %v312, %v553
      %v617 = vadd.f32 %v313, %v556
      %v618 = vadd.f32 %v314, %v558
      %v619 = vadd.f32 %v315, %v561
      %v620 = vadd.f32 %v316, %v563
      %v621 = vadd.f32 %v317, %v566
      %v622 = vadd.f32 %v318, %v568
      %v623 = vadd.f32 %v319, %v571
      %v624 = vadd.f32 %v320, %v573
      %v625 = vadd.f32 %v321, %v576
      %v626 = vadd.f32 %v322, %v578
      %v627 = vadd.f32 %v323, %v581
      %v628 = vadd.f32 %v324, %v583
      %v629 = vadd.f32 %v325, %v586
      %v630 = vadd.f32 %v326, %v588
      %v631 = vadd.f32 %v327, %v591
      %v632 = vadd.f32 %v328, %v593
      %v633 = vadd.f32 %v329, %v596
      %v634 = vadd.f32 %v330, %v598
      %v635 = vadd.f32 %v331, %v601
      %v636 = vadd.f32 %v332, %v603
      %vm637 = vcmask 523264
      %638 = vst.msk [vmem:[#allocation2] sm:$0xff] %vm637, %v605
      %639 = vst.msk [vmem:[#allocation2 + $0x8] sm:$0xff] %vm637, %v606
      %640 = vst.msk [vmem:[#allocation2 + $0x10] sm:$0xff] %vm637, %v607
      %641 = vst.msk [vmem:[#allocation2 + $0x18] sm:$0xff] %vm637, %v608
      %642 = vst.msk [vmem:[#allocation2 + $0x20] sm:$0xff] %vm637, %v609
      %643 = vst.msk [vmem:[#allocation2 + $0x28] sm:$0xff] %vm637, %v610
      %644 = vst.msk [vmem:[#allocation2 + $0x30] sm:$0xff] %vm637, %v611
      %645 = vst.msk [vmem:[#allocation2 + $0x38] sm:$0xff] %vm637, %v612
      %646 = vst.msk [vmem:[#allocation2 + $0x40] sm:$0xff] %vm637, %v613
      %647 = vst.msk [vmem:[#allocation2 + $0x48] sm:$0xff] %vm637, %v614
      %648 = vst.msk [vmem:[#allocation2 + $0x50] sm:$0xff] %vm637, %v615
      %649 = vst.msk [vmem:[#allocation2 + $0x58] sm:$0xff] %vm637, %v616
      %650 = vst.msk [vmem:[#allocation2 + $0x60] sm:$0xff] %vm637, %v617
      %651 = vst.msk [vmem:[#allocation2 + $0x68] sm:$0xff] %vm637, %v618
      %652 = vst.msk [vmem:[#allocation2 + $0x70] sm:$0xff] %vm637, %v619
      %653 = vst.msk [vmem:[#allocation2 + $0x78] sm:$0xff] %vm637, %v620
      %654 = vst.msk [vmem:[#allocation2 + $0x80] sm:$0xff] %vm637, %v621
      %655 = vst.msk [vmem:[#allocation2 + $0x88] sm:$0xff] %vm637, %v622
      %656 = vst.msk [vmem:[#allocation2 + $0x90] sm:$0xff] %vm637, %v623
      %657 = vst.msk [vmem:[#allocation2 + $0x98] sm:$0xff] %vm637, %v624
      %658 = vst.msk [vmem:[#allocation2 + $0xa0] sm:$0xff] %vm637, %v625
      %659 = vst.msk [vmem:[#allocation2 + $0xa8] sm:$0xff] %vm637, %v626
      %660 = vst.msk [vmem:[#allocation2 + $0xb0] sm:$0xff] %vm637, %v627
      %661 = vst.msk [vmem:[#allocation2 + $0xb8] sm:$0xff] %vm637, %v628
      %662 = vst.msk [vmem:[#allocation2 + $0xc0] sm:$0xff] %vm637, %v629
      %663 = vst.msk [vmem:[#allocation2 + $0xc8] sm:$0xff] %vm637, %v630
      %664 = vst.msk [vmem:[#allocation2 + $0xd0] sm:$0xff] %vm637, %v631
      %665 = vst.msk [vmem:[#allocation2 + $0xd8] sm:$0xff] %vm637, %v632
      %666 = vst.msk [vmem:[#allocation2 + $0xe0] sm:$0xff] %vm637, %v633
      %667 = vst.msk [vmem:[#allocation2 + $0xe8] sm:$0xff] %vm637, %v634
      %668 = vst.msk [vmem:[#allocation2 + $0xf0] sm:$0xff] %vm637, %v635
      %669 = vst.msk [vmem:[#allocation2 + $0xf8] sm:$0xff] %vm637, %v636
      // Predicated region
      $region37: #{tpu_custom_call.1} parent=31 // pred_check
        %p670 = pneg %p260
      $region38: #{tpu_custom_call.1} parent=31 // pred_check_branch
        %672 = sbr.rel (%p670) target = $region40
      $region39: #{tpu_custom_call.1} parent=31 // pred_region
        %v673 = vld [vmem:[#allocation2] sm:$0xff]
        %v674 = vld [vmem:[#allocation2 + $0x8] sm:$0xff]
        %v675 = vld [vmem:[#allocation2 + $0x10] sm:$0xff]
        %v676 = vld [vmem:[#allocation2 + $0x18] sm:$0xff]
        %v677 = vld [vmem:[#allocation2 + $0x20] sm:$0xff]
        %v678 = vld [vmem:[#allocation2 + $0x28] sm:$0xff]
        %v679 = vld [vmem:[#allocation2 + $0x30] sm:$0xff]
        %v680 = vld [vmem:[#allocation2 + $0x38] sm:$0xff]
        %v681 = vld [vmem:[#allocation2 + $0x40] sm:$0xff]
        %v682 = vld [vmem:[#allocation2 + $0x48] sm:$0xff]
        %v683 = vld [vmem:[#allocation2 + $0x50] sm:$0xff]
        %v684 = vld [vmem:[#allocation2 + $0x58] sm:$0xff]
        %v685 = vld [vmem:[#allocation2 + $0x60] sm:$0xff]
        %v686 = vld [vmem:[#allocation2 + $0x68] sm:$0xff]
        %v687 = vld [vmem:[#allocation2 + $0x70] sm:$0xff]
        %v688 = vld [vmem:[#allocation2 + $0x78] sm:$0xff]
        %v689 = vld [vmem:[#allocation2 + $0x80] sm:$0xff]
        %v690 = vld [vmem:[#allocation2 + $0x88] sm:$0xff]
        %v691 = vld [vmem:[#allocation2 + $0x90] sm:$0xff]
        %v692 = vld [vmem:[#allocation2 + $0x98] sm:$0xff]
        %v693 = vld [vmem:[#allocation2 + $0xa0] sm:$0xff]
        %v694 = vld [vmem:[#allocation2 + $0xa8] sm:$0xff]
        %v695 = vld [vmem:[#allocation2 + $0xb0] sm:$0xff]
        %v696 = vld [vmem:[#allocation2 + $0xb8] sm:$0xff]
        %v697 = vld [vmem:[#allocation2 + $0xc0] sm:$0xff]
        %v698 = vld [vmem:[#allocation2 + $0xc8] sm:$0xff]
        %v699 = vld [vmem:[#allocation2 + $0xd0] sm:$0xff]
        %v700 = vld [vmem:[#allocation2 + $0xd8] sm:$0xff]
        %v701 = vld [vmem:[#allocation2 + $0xe0] sm:$0xff]
        %v702 = vld [vmem:[#allocation2 + $0xe8] sm:$0xff]
        %v703 = vld [vmem:[#allocation2 + $0xf0] sm:$0xff]
        %v704 = vld [vmem:[#allocation2 + $0xf8] sm:$0xff]
        %v705 = vmax.f32 %v673, 0.0
        %v706 = vmax.f32 %v674, 0.0
        %v707 = vmax.f32 %v675, 0.0
        %v708 = vmax.f32 %v676, 0.0
        %v709 = vmax.f32 %v677, 0.0
        %v710 = vmax.f32 %v678, 0.0
        %v711 = vmax.f32 %v679, 0.0
        %v712 = vmax.f32 %v680, 0.0
        %v713 = vmax.f32 %v681, 0.0
        %v714 = vmax.f32 %v682, 0.0
        %v715 = vmax.f32 %v683, 0.0
        %v716 = vmax.f32 %v684, 0.0
        %v717 = vmax.f32 %v685, 0.0
        %v718 = vmax.f32 %v686, 0.0
        %v719 = vmax.f32 %v687, 0.0
        %v720 = vmax.f32 %v688, 0.0
        %v721 = vmax.f32 %v689, 0.0
        %v722 = vmax.f32 %v690, 0.0
        %v723 = vmax.f32 %v691, 0.0
        %v724 = vmax.f32 %v692, 0.0
        %v725 = vmax.f32 %v693, 0.0
        %v726 = vmax.f32 %v694, 0.0
        %v727 = vmax.f32 %v695, 0.0
        %v728 = vmax.f32 %v696, 0.0
        %v729 = vmax.f32 %v697, 0.0
        %v730 = vmax.f32 %v698, 0.0
        %v731 = vmax.f32 %v699, 0.0
        %v732 = vmax.f32 %v700, 0.0
        %v733 = vmax.f32 %v701, 0.0
        %v734 = vmax.f32 %v702, 0.0
        %v735 = vmax.f32 %v703, 0.0
        %v736 = vmax.f32 %v704, 0.0
        %v737 = vpack.c.bf16 %v705, %v705
        %v738 = vpack.c.bf16 %v706, %v706
        %v739 = vpack.c.bf16 %v707, %v707
        %v740 = vpack.c.bf16 %v708, %v708
        %v741 = vpack.c.bf16 %v709, %v709
        %v742 = vpack.c.bf16 %v710, %v710
        %v743 = vpack.c.bf16 %v711, %v711
        %v744 = vpack.c.bf16 %v712, %v712
        %v745 = vpack.c.bf16 %v713, %v713
        %v746 = vpack.c.bf16 %v714, %v714
        %v747 = vpack.c.bf16 %v715, %v715
        %v748 = vpack.c.bf16 %v716, %v716
        %v749 = vpack.c.bf16 %v717, %v717
        %v750 = vpack.c.bf16 %v718, %v718
        %v751 = vpack.c.bf16 %v719, %v719
        %v752 = vpack.c.bf16 %v720, %v720
        %v753 = vpack.c.bf16 %v721, %v721
        %v754 = vpack.c.bf16 %v722, %v722
        %v755 = vpack.c.bf16 %v723, %v723
        %v756 = vpack.c.bf16 %v724, %v724
        %v757 = vpack.c.bf16 %v725, %v725
        %v758 = vpack.c.bf16 %v726, %v726
        %v759 = vpack.c.bf16 %v727, %v727
        %v760 = vpack.c.bf16 %v728, %v728
        %v761 = vpack.c.bf16 %v729, %v729
        %v762 = vpack.c.bf16 %v730, %v730
        %v763 = vpack.c.bf16 %v731, %v731
        %v764 = vpack.c.bf16 %v732, %v732
        %v765 = vpack.c.bf16 %v733, %v733
        %v766 = vpack.c.bf16 %v734, %v734
        %v767 = vpack.c.bf16 %v735, %v735
        %v768 = vpack.c.bf16 %v736, %v736
        %vm769 = vcmask 519168
        %770 = vst.msk [vmem:[%s257] sm:$0xf] %vm769, %v737
        %771 = vst.msk [vmem:[%s257 + $0x4] sm:$0xf] %vm769, %v738
        %772 = vst.msk [vmem:[%s257 + $0x8] sm:$0xf] %vm769, %v739
        %773 = vst.msk [vmem:[%s257 + $0xc] sm:$0xf] %vm769, %v740
        %774 = vst.msk [vmem:[%s257 + $0x10] sm:$0xf] %vm769, %v741
        %775 = vst.msk [vmem:[%s257 + $0x14] sm:$0xf] %vm769, %v742
        %776 = vst.msk [vmem:[%s257 + $0x18] sm:$0xf] %vm769, %v743
        %777 = vst.msk [vmem:[%s257 + $0x1c] sm:$0xf] %vm769, %v744
        %778 = vst.msk [vmem:[%s257 + $0x20] sm:$0xf] %vm769, %v745
        %779 = vst.msk [vmem:[%s257 + $0x24] sm:$0xf] %vm769, %v746
        %780 = vst.msk [vmem:[%s257 + $0x28] sm:$0xf] %vm769, %v747
        %781 = vst.msk [vmem:[%s257 + $0x2c] sm:$0xf] %vm769, %v748
        %782 = vst.msk [vmem:[%s257 + $0x30] sm:$0xf] %vm769, %v749
        %783 = vst.msk [vmem:[%s257 + $0x34] sm:$0xf] %vm769, %v750
        %784 = vst.msk [vmem:[%s257 + $0x38] sm:$0xf] %vm769, %v751
        %785 = vst.msk [vmem:[%s257 + $0x3c] sm:$0xf] %vm769, %v752
        %786 = vst.msk [vmem:[%s257 + $0x40] sm:$0xf] %vm769, %v753
        %787 = vst.msk [vmem:[%s257 + $0x44] sm:$0xf] %vm769, %v754
        %788 = vst.msk [vmem:[%s257 + $0x48] sm:$0xf] %vm769, %v755
        %789 = vst.msk [vmem:[%s257 + $0x4c] sm:$0xf] %vm769, %v756
        %790 = vst.msk [vmem:[%s257 + $0x50] sm:$0xf] %vm769, %v757
        %791 = vst.msk [vmem:[%s257 + $0x54] sm:$0xf] %vm769, %v758
        %792 = vst.msk [vmem:[%s257 + $0x58] sm:$0xf] %vm769, %v759
        %793 = vst.msk [vmem:[%s257 + $0x5c] sm:$0xf] %vm769, %v760
        %794 = vst.msk [vmem:[%s257 + $0x60] sm:$0xf] %vm769, %v761
        %795 = vst.msk [vmem:[%s257 + $0x64] sm:$0xf] %vm769, %v762
        %796 = vst.msk [vmem:[%s257 + $0x68] sm:$0xf] %vm769, %v763
        %797 = vst.msk [vmem:[%s257 + $0x6c] sm:$0xf] %vm769, %v764
        %798 = vst.msk [vmem:[%s257 + $0x70] sm:$0xf] %vm769, %v765
        %799 = vst.msk [vmem:[%s257 + $0x74] sm:$0xf] %vm769, %v766
        %800 = vst.msk [vmem:[%s257 + $0x78] sm:$0xf] %vm769, %v767
        %801 = vst.msk [vmem:[%s257 + $0x7c] sm:$0xf] %vm769, %v768
      $region40: #{tpu_custom_call.1} parent=31 // pred_fallthru
        _
      %s802 = smul.u32 32, %s19
      %p803 = scmp.lt.s32.totalorder %s802, 1023
      %s804 = scalar_select %p803, %s802, 1023
      %p805 = scmp.lt.s32.totalorder %s20, 0
      %s806 = scalar_select %p805, %s20, 0
      %s807 = sadd.s32 %s806, %s804
      %s808 = smul.addr %s807, 4
      %s809 = scalar_lea.vmem %s3, %s808
      // Predicated region
      $region41: #{tpu_custom_call.1} parent=31 // pred_check
        %p810 = pneg %p135
      $region42: #{tpu_custom_call.1} parent=31 // pred_check_branch
        %812 = sbr.rel (%p810) target = $region44
      $region43: #{tpu_custom_call.1} parent=31 // pred_region
        %s813 = smul.u32 32, %s19
      $region44: #{tpu_custom_call.1} parent=31 // pred_fallthru
        _
    $region32: #{tpu_custom_call.1} parent=5 // pred_fallthru
      _
    %p814 = scmp.le.s32.totalorder 2, %s9
    // Predicated region
    $region45: #{tpu_custom_call.1} parent=5 // pred_check
      %p815 = pneg %p814
    $region46: #{tpu_custom_call.1} parent=5 // pred_check_branch
      %817 = sbr.rel (%p815) target = $region48
    $region47: #{tpu_custom_call.1} parent=5 // pred_region
      %s818 = ssub.s32 %s9, 2
      // Predicated region
      $region49: #{tpu_custom_call.1} parent=47 // pred_check
        %p819 = pneg %p141
      $region50: #{tpu_custom_call.1} parent=47 // pred_check_branch
        %821 = sbr.rel (%p819) target = $region52
      $region51: #{tpu_custom_call.1} parent=47 // pred_region
        %s822 = smul.u32 32, %s22
        %p823 = scmp.lt.s32.totalorder %s822, 1023
        %s824 = scalar_select %p823, %s822, 1023
        %p825 = scmp.lt.s32.totalorder %s23, 0
        %s826 = scalar_select %p825, %s23, 0
        %s827 = sadd.s32 %s826, %s824
        %s828 = smul.addr %s827, 4
        %s829 = scalar_lea.vmem %s3, %s828
      $region52: #{tpu_custom_call.1} parent=47 // pred_fallthru
        _
    $region48: #{tpu_custom_call.1} parent=5 // pred_fallthru
      _
  $region6: #{tpu_custom_call.1} parent=0 // loop_footer
    %s13 = sadd.s32 1, %s9
  $region7: #{tpu_custom_call.1} parent=0 // loop_footer_branch
    %8 = sbr.rel target = $region3
  $region8: #{tpu_custom_call.1} parent=0 // loop_exit
    _

</llo_original>
